<compile_context>
chip_gen: v5e
topology: v5e:2x2
jax: 0.10.0
libtpu: 0.0.40
codegen_flags: <defaults>
</compile_context>

<pallas_src>
import functools

import jax
import jax.numpy as jnp
from jax.experimental import pallas as pl
from jax.experimental.pallas import tpu as pltpu


def _round_up(x, m):
    return (x + m - 1) // m * m


def _tpu_config():
    """Generation-aware knobs: bf16 EUP/VALU availability, VMEM capacity and
    whether two TensorCores share the grid."""
    kind = ""
    try:
        kind = jax.devices()[0].device_kind.lower()
    except Exception:
        pass

    if "v7" in kind:
        cfg = {"eup_bf16": True, "vmem": 64 << 20, "two_tc": True}
    elif "v6" in kind:
        cfg = {"eup_bf16": True, "vmem": 128 << 20, "two_tc": False}
    elif "v5e" in kind or "v5 lite" in kind or "v5lite" in kind:
        cfg = {"eup_bf16": False, "vmem": 128 << 20, "two_tc": False}
    else:
        # Unknown / older generation: conservative defaults.
        cfg = {"eup_bf16": False, "vmem": 64 << 20, "two_tc": True}

    try:
        cfg["vmem"] = int(pltpu.get_tpu_info().vmem_capacity_bytes)
    except Exception:
        pass
    return cfg


def _choose_lp_tile(Lp, Lq_pad, Hp, V, budget_bytes, two_tc, B, sub):
    """Largest Lp tile (multiple of `sub` sublanes) whose dominant per-tile
    intermediates (~8 B per (row, H+Lq) element: f32 + bf16 copies of the
    scaled-weight stack and the tanh output, plus slack for s/e/a temps and
    the double-buffered pipeline blocks) stay under budget_bytes; keeps at
    least 2 grid steps on dual-TensorCore chips so neither core idles."""
    per_row = 8 * V * (Hp + Lq_pad)
    by_budget = max(sub, (budget_bytes // per_row) // sub * sub)
    tp = max(sub, min(_round_up(Lp, sub), 512, by_budget))
    while two_tc and B * ((Lp + tp - 1) // tp) < 2 and tp > sub:
        tp = max(sub, _round_up(tp // 2, sub))
    return tp


def _dot_attention_kernel(hq_ref, hp_ref, w_ref, v_ref, out_ref, *,
                          lq_valid, compute_dtype):
    # hq_ref : (1, Lq_pad, Hp)  query states (H on lanes)   VMEM
    # hp_ref : (1, tp, Hp)      tile of passage states      VMEM
    # w_ref  : (V, Hp)          torch W.weight              VMEM
    # v_ref  : (1, V)           torch v.weight              SMEM (scalars)
    # out_ref: (1, tp, Hp)
    hq = hq_ref[0]                        # (Lq_pad, Hp) f32
    hp_t = hp_ref[0]                      # (tp, Hp)     f32
    W = w_ref[...]                        # (V, Hp)      f32

    V = W.shape[0]
    tp = hp_t.shape[0]
    lq_pad = hq.shape[0]

    # Fused h_mul @ W^T:  w_stack[j*tp + p, h] = W[j, h] * hp[p, h]
    # (built in f32 so the (V,tp,Hp)->(V*tp,Hp) reshape is sublane-aligned,
    #  then cast to bf16 for the MXU).
    w_stack = (W[:, None, :] * hp_t[None, :, :]).reshape(V * tp, -1)
    hq_b = hq.astype(jnp.bfloat16)        # reused by both matmuls

    # One MXU matmul (V*tp, Hp) x (Hp, Lq_pad); bf16 operands, f32 accumulation.
    s_lin = jnp.dot(w_stack.astype(jnp.bfloat16), hq_b.T,
                    preferred_element_type=jnp.float32)         # (V*tp, Lq_pad)

    # tanh on the EUP; bf16 on v6e/v7x (bf16 EUP), f32 on v5e.
    s_w = jnp.tanh(s_lin.astype(compute_dtype))
    s_w3 = s_w.reshape(V, tp, lq_pad)

    # s[p, q] = sum_j v[j] * tanh(...)  — v[j] read as SMEM scalars, combined
    # with a pairwise tree to break the serial VPU dependency chain.
    terms = [v_ref[0, j].astype(compute_dtype) * s_w3[j] for j in range(V)]
    while len(terms) > 1:
        nxt = [terms[i] + terms[i + 1] for i in range(0, len(terms) - 1, 2)]
        if len(terms) % 2:
            nxt.append(terms[-1])
        terms = nxt
    s = terms[0].astype(jnp.float32)                            # (tp, Lq_pad)

    # Zero-padded key columns must not receive softmax mass.
    if lq_valid < lq_pad:
        col = jax.lax.broadcasted_iota(jnp.int32, (tp, lq_pad), 1)
        s = jnp.where(col < lq_valid, s, -1e30)

    # Max-stabilized softmax over Lq (lane axis); divide -> EUP reciprocal.
    m = jnp.max(s, axis=-1, keepdims=True)
    e = jnp.exp(s - m)
    a = e * pl.reciprocal(jnp.sum(e, axis=-1, keepdims=True), approx=True)

    # q_att tile = a @ hq : (tp, Lq_pad) x (Lq_pad, Hp); bf16 MXU, f32 accum.
    out_ref[0] = jnp.dot(a.astype(jnp.bfloat16), hq_b,
                         preferred_element_type=jnp.float32).astype(out_ref.dtype)


@jax.jit
def dot_attention_unit(hq, hp, w_vh, v_w):
    """DotAttentionUnit forward.

    hq  : (B, Lq, H) float32
    hp  : (B, Lp, H) float32
    w_vh: (V, H)     == torch nn.Linear(h_size, v_size, bias=False).weight
    v_w : (1, V)     == torch nn.Linear(v_size, 1, bias=False).weight
    returns q_att: (B, Lp, H)
    """
    B, Lq, H = hq.shape
    _, Lp, _ = hp.shape
    V = w_vh.shape[0]

    cfg = _tpu_config()
    compute_dtype = jnp.bfloat16 if cfg["eup_bf16"] else jnp.float32
    # Sublane quantum for the (V, tp, .) <-> (V*tp, .) reshapes/slices:
    # 16 rows for packed bf16, 8 for f32.
    sub = 16 if compute_dtype == jnp.bfloat16 else 8
    if cfg["vmem"] <= (64 << 20):          # v7x: 64 MiB VMEM per TensorCore
        tile_budget, vmem_limit = 8 << 20, 40 << 20
    else:                                  # v5e / v6e: 128 MiB VMEM
        tile_budget, vmem_limit = 20 << 20, 80 << 20

    # Lane-dense padding: H (lane axis everywhere) and Lq (lane axis of the
    # tanh/softmax chain) padded to multiples of 128; Lp padded to the tile.
    Hp = _round_up(H, 128)
    Lq_pad = _round_up(Lq, 128)
    tp = _choose_lp_tile(Lp, Lq_pad, Hp, V, tile_budget, cfg["two_tc"], B, sub)
    Lp_pad = _round_up(Lp, tp)
    n_pt = Lp_pad // tp

    hq_p = jnp.pad(hq, ((0, 0), (0, Lq_pad - Lq), (0, Hp - H)))
    hp_p = jnp.pad(hp, ((0, 0), (0, Lp_pad - Lp), (0, Hp - H)))
    w_p = jnp.pad(w_vh, ((0, 0), (0, Hp - H)))

    kernel = functools.partial(_dot_attention_kernel,
                               lq_valid=Lq, compute_dtype=compute_dtype)

    cost = pl.CostEstimate(
        flops=2 * B * Lp_pad * Lq_pad * Hp * (V + 1),
        transcendentals=B * Lp_pad * Lq_pad * (V + 1),
        bytes_accessed=4 * (B * Lq_pad * Hp + 2 * B * Lp_pad * Hp + V * Hp),
    )

    out = pl.pallas_call(
        kernel,
        out_shape=jax.ShapeDtypeStruct((B, Lp_pad, Hp), hq.dtype),
        grid=(B, n_pt),
        in_specs=[
            pl.BlockSpec((1, Lq_pad, Hp), lambda b, p: (b, 0, 0)),
            pl.BlockSpec((1, tp, Hp), lambda b, p: (b, p, 0)),
            pl.BlockSpec((V, Hp), lambda b, p: (0, 0)),
            pl.BlockSpec(memory_space=pltpu.MemorySpace.SMEM),
        ],
        out_specs=pl.BlockSpec((1, tp, Hp), lambda b, p: (b, p, 0)),
        compiler_params=pltpu.CompilerParams(
            dimension_semantics=("parallel", "parallel"),
            vmem_limit_bytes=vmem_limit,
        ),
        cost_estimate=cost,
    )(hq_p, hp_p, w_p, v_w)

    return out[:, :Lp, :H]


def dot_attention_reference(hq, hp, w_vh, v_w):
    """Pure-JAX f32 reference mirroring the PyTorch forward (B, Lp, Lq > 1)."""
    h_mul = hp[:, :, None, :] * hq[:, None, :, :]                  # (B, Lp, Lq, H)
    s_w = jnp.tanh(jnp.einsum("bpqh,vh->bpqv", h_mul, w_vh))       # (B, Lp, Lq, V)
    s = jnp.einsum("bpqv,v->bpq", s_w, v_w[0])                     # (B, Lp, Lq)
    a = jax.nn.softmax(s, axis=2)
    return jnp.einsum("bpq,bqh->bph", a, hq)                       # (B, Lp, H)


if __name__ == "__main__":
    # Small deterministic example: h_size=32, v_size=16.
    B, Lq, Lp, H, V = 2, 8, 8, 32, 16

    key = jax.random.PRNGKey(0)
    k_hq, k_hp, k_w, k_v = jax.random.split(key, 4)

    hq = jax.random.normal(k_hq, (B, Lq, H), dtype=jnp.float32)
    hp = jax.random.normal(k_hp, (B, Lp, H), dtype=jnp.float32)
    w_vh = 0.1 * jax.random.normal(k_w, (V, H), dtype=jnp.float32)   # W.weight (V, H)
    v_w = 0.1 * jax.random.normal(k_v, (1, V), dtype=jnp.float32)    # v.weight (1, V)

    out = dot_attention_unit(hq, hp, w_vh, v_w)
    out = jax.block_until_ready(out)

    ref = dot_attention_reference(hq, hp, w_vh, v_w)
    assert out.shape == (B, Lp, H)
    max_err = float(jnp.max(jnp.abs(out - ref)))
    # Tolerance covers bf16 MXU operands everywhere, the bf16 tanh/V-reduce on
    # v6e/v7x, and the approximate EUP reciprocal in the softmax.
    assert jnp.allclose(out, ref, atol=3e-2, rtol=3e-2), (
        f"mismatch vs reference (max abs err {max_err})"
    )

    print("KERNEL_OK")
</pallas_src>

<mosaic_0001>
module attributes {stable_mosaic.version = 11 : i64} {
  func.func @_dot_attention_kernel(%arg0: i32, %arg1: i32, %arg2: memref<1x128x128xf32, #tpu.memory_space<vmem>>, %arg3: memref<1x8x128xf32, #tpu.memory_space<vmem>>, %arg4: memref<16x128xf32, #tpu.memory_space<vmem>>, %arg5: memref<1x16xf32, #tpu.memory_space<smem>>, %arg6: memref<1x8x128xf32, #tpu.memory_space<vmem>>) attributes {dimension_semantics = [#tpu.dimension_semantics<parallel>, #tpu.dimension_semantics<parallel>], iteration_bounds = array<i64: 2, 1>, scalar_prefetch = 0 : i64, scratch_operands = 0 : i64, tpu.core_type = #tpu.core_type<tc>, window_params = [{transform_indices = @transform_0, window_bounds = array<i64: 1, 128, 128>}, {transform_indices = @transform_1, window_bounds = array<i64: 1, 8, 128>}, {pipeline_mode = #tpu.pipeline_mode<synchronous>, transform_indices = @transform_2, window_bounds = array<i64: 16, 128>}, {transform_indices = @transform_3, window_bounds = array<i64: 1, 16>}, {transform_indices = @transform_4, window_bounds = array<i64: 1, 8, 128>}]} {
    %c0 = arith.constant 0 : index
    %c0_0 = arith.constant 0 : index
    %c0_1 = arith.constant 0 : index
    %0 = vector.load %arg2[%c0, %c0_0, %c0_1] : memref<1x128x128xf32, #tpu.memory_space<vmem>>, vector<1x128x128xf32>
    %1 = vector.shape_cast %0 : vector<1x128x128xf32> to vector<128x128xf32>
    %c0_2 = arith.constant 0 : index
    %c0_3 = arith.constant 0 : index
    %c0_4 = arith.constant 0 : index
    %2 = vector.load %arg3[%c0_2, %c0_3, %c0_4] : memref<1x8x128xf32, #tpu.memory_space<vmem>>, vector<1x8x128xf32>
    %3 = vector.shape_cast %2 : vector<1x8x128xf32> to vector<8x128xf32>
    %c0_5 = arith.constant 0 : index
    %c0_6 = arith.constant 0 : index
    %4 = vector.load %arg4[%c0_5, %c0_6] : memref<16x128xf32, #tpu.memory_space<vmem>>, vector<16x128xf32>
    %5 = vector.shape_cast %4 : vector<16x128xf32> to vector<16x1x128xf32>
    %6 = vector.shape_cast %3 : vector<8x128xf32> to vector<1x8x128xf32>
    %7 = vector.broadcast %5 : vector<16x1x128xf32> to vector<16x8x128xf32>
    %8 = vector.broadcast %6 : vector<1x8x128xf32> to vector<16x8x128xf32>
    %9 = arith.mulf %7, %8 : vector<16x8x128xf32>
    %10 = vector.shape_cast %9 : vector<16x8x128xf32> to vector<128x128xf32>
    %11 = arith.truncf %1 : vector<128x128xf32> to vector<128x128xbf16>
    %12 = arith.truncf %10 : vector<128x128xf32> to vector<128x128xbf16>
    %13 = tpu.transpose %11, [1, 0] : vector<128x128xbf16> -> vector<128x128xbf16>
    %cst = arith.constant dense<0.000000e+00> : vector<128x128xf32>
    %14 = tpu.matmul %12, %13, %cst {dimension_numbers = #tpu.dot_dimension_numbers<[1], [0], [0], [1], [0, 0, 1, 1], [], []>} : vector<128x128xbf16>, vector<128x128xbf16>, vector<128x128xf32> -> vector<128x128xf32>
    %15 = math.tanh %14 : vector<128x128xf32>
    %16 = vector.shape_cast %15 : vector<128x128xf32> to vector<16x8x128xf32>
    %c0_7 = arith.constant 0 : index
    %c0_8 = arith.constant 0 : index
    %17 = memref.load %arg5[%c0_7, %c0_8] : memref<1x16xf32, #tpu.memory_space<smem>>
    %18 = vector.extract_strided_slice %16 {offsets = [0, 0, 0], sizes = [1, 8, 128], strides = [1, 1, 1]} : vector<16x8x128xf32> to vector<1x8x128xf32>
    %19 = vector.shape_cast %18 : vector<1x8x128xf32> to vector<8x128xf32>
    %20 = vector.broadcast %17 : f32 to vector<8x128xf32>
    %21 = arith.mulf %20, %19 : vector<8x128xf32>
    %c0_9 = arith.constant 0 : index
    %c1 = arith.constant 1 : index
    %22 = memref.load %arg5[%c0_9, %c1] : memref<1x16xf32, #tpu.memory_space<smem>>
    %23 = vector.extract_strided_slice %16 {offsets = [1, 0, 0], sizes = [1, 8, 128], strides = [1, 1, 1]} : vector<16x8x128xf32> to vector<1x8x128xf32>
    %24 = vector.shape_cast %23 : vector<1x8x128xf32> to vector<8x128xf32>
    %25 = vector.broadcast %22 : f32 to vector<8x128xf32>
    %26 = arith.mulf %25, %24 : vector<8x128xf32>
    %c0_10 = arith.constant 0 : index
    %c2 = arith.constant 2 : index
    %27 = memref.load %arg5[%c0_10, %c2] : memref<1x16xf32, #tpu.memory_space<smem>>
    %28 = vector.extract_strided_slice %16 {offsets = [2, 0, 0], sizes = [1, 8, 128], strides = [1, 1, 1]} : vector<16x8x128xf32> to vector<1x8x128xf32>
    %29 = vector.shape_cast %28 : vector<1x8x128xf32> to vector<8x128xf32>
    %30 = vector.broadcast %27 : f32 to vector<8x128xf32>
    %31 = arith.mulf %30, %29 : vector<8x128xf32>
    %c0_11 = arith.constant 0 : index
    %c3 = arith.constant 3 : index
    %32 = memref.load %arg5[%c0_11, %c3] : memref<1x16xf32, #tpu.memory_space<smem>>
    %33 = vector.extract_strided_slice %16 {offsets = [3, 0, 0], sizes = [1, 8, 128], strides = [1, 1, 1]} : vector<16x8x128xf32> to vector<1x8x128xf32>
    %34 = vector.shape_cast %33 : vector<1x8x128xf32> to vector<8x128xf32>
    %35 = vector.broadcast %32 : f32 to vector<8x128xf32>
    %36 = arith.mulf %35, %34 : vector<8x128xf32>
    %c0_12 = arith.constant 0 : index
    %c4 = arith.constant 4 : index
    %37 = memref.load %arg5[%c0_12, %c4] : memref<1x16xf32, #tpu.memory_space<smem>>
    %38 = vector.extract_strided_slice %16 {offsets = [4, 0, 0], sizes = [1, 8, 128], strides = [1, 1, 1]} : vector<16x8x128xf32> to vector<1x8x128xf32>
    %39 = vector.shape_cast %38 : vector<1x8x128xf32> to vector<8x128xf32>
    %40 = vector.broadcast %37 : f32 to vector<8x128xf32>
    %41 = arith.mulf %40, %39 : vector<8x128xf32>
    %c0_13 = arith.constant 0 : index
    %c5 = arith.constant 5 : index
    %42 = memref.load %arg5[%c0_13, %c5] : memref<1x16xf32, #tpu.memory_space<smem>>
    %43 = vector.extract_strided_slice %16 {offsets = [5, 0, 0], sizes = [1, 8, 128], strides = [1, 1, 1]} : vector<16x8x128xf32> to vector<1x8x128xf32>
    %44 = vector.shape_cast %43 : vector<1x8x128xf32> to vector<8x128xf32>
    %45 = vector.broadcast %42 : f32 to vector<8x128xf32>
    %46 = arith.mulf %45, %44 : vector<8x128xf32>
    %c0_14 = arith.constant 0 : index
    %c6 = arith.constant 6 : index
    %47 = memref.load %arg5[%c0_14, %c6] : memref<1x16xf32, #tpu.memory_space<smem>>
    %48 = vector.extract_strided_slice %16 {offsets = [6, 0, 0], sizes = [1, 8, 128], strides = [1, 1, 1]} : vector<16x8x128xf32> to vector<1x8x128xf32>
    %49 = vector.shape_cast %48 : vector<1x8x128xf32> to vector<8x128xf32>
    %50 = vector.broadcast %47 : f32 to vector<8x128xf32>
    %51 = arith.mulf %50, %49 : vector<8x128xf32>
    %c0_15 = arith.constant 0 : index
    %c7 = arith.constant 7 : index
    %52 = memref.load %arg5[%c0_15, %c7] : memref<1x16xf32, #tpu.memory_space<smem>>
    %53 = vector.extract_strided_slice %16 {offsets = [7, 0, 0], sizes = [1, 8, 128], strides = [1, 1, 1]} : vector<16x8x128xf32> to vector<1x8x128xf32>
    %54 = vector.shape_cast %53 : vector<1x8x128xf32> to vector<8x128xf32>
    %55 = vector.broadcast %52 : f32 to vector<8x128xf32>
    %56 = arith.mulf %55, %54 : vector<8x128xf32>
    %c0_16 = arith.constant 0 : index
    %c8 = arith.constant 8 : index
    %57 = memref.load %arg5[%c0_16, %c8] : memref<1x16xf32, #tpu.memory_space<smem>>
    %58 = vector.extract_strided_slice %16 {offsets = [8, 0, 0], sizes = [1, 8, 128], strides = [1, 1, 1]} : vector<16x8x128xf32> to vector<1x8x128xf32>
    %59 = vector.shape_cast %58 : vector<1x8x128xf32> to vector<8x128xf32>
    %60 = vector.broadcast %57 : f32 to vector<8x128xf32>
    %61 = arith.mulf %60, %59 : vector<8x128xf32>
    %c0_17 = arith.constant 0 : index
    %c9 = arith.constant 9 : index
    %62 = memref.load %arg5[%c0_17, %c9] : memref<1x16xf32, #tpu.memory_space<smem>>
    %63 = vector.extract_strided_slice %16 {offsets = [9, 0, 0], sizes = [1, 8, 128], strides = [1, 1, 1]} : vector<16x8x128xf32> to vector<1x8x128xf32>
    %64 = vector.shape_cast %63 : vector<1x8x128xf32> to vector<8x128xf32>
    %65 = vector.broadcast %62 : f32 to vector<8x128xf32>
    %66 = arith.mulf %65, %64 : vector<8x128xf32>
    %c0_18 = arith.constant 0 : index
    %c10 = arith.constant 10 : index
    %67 = memref.load %arg5[%c0_18, %c10] : memref<1x16xf32, #tpu.memory_space<smem>>
    %68 = vector.extract_strided_slice %16 {offsets = [10, 0, 0], sizes = [1, 8, 128], strides = [1, 1, 1]} : vector<16x8x128xf32> to vector<1x8x128xf32>
    %69 = vector.shape_cast %68 : vector<1x8x128xf32> to vector<8x128xf32>
    %70 = vector.broadcast %67 : f32 to vector<8x128xf32>
    %71 = arith.mulf %70, %69 : vector<8x128xf32>
    %c0_19 = arith.constant 0 : index
    %c11 = arith.constant 11 : index
    %72 = memref.load %arg5[%c0_19, %c11] : memref<1x16xf32, #tpu.memory_space<smem>>
    %73 = vector.extract_strided_slice %16 {offsets = [11, 0, 0], sizes = [1, 8, 128], strides = [1, 1, 1]} : vector<16x8x128xf32> to vector<1x8x128xf32>
    %74 = vector.shape_cast %73 : vector<1x8x128xf32> to vector<8x128xf32>
    %75 = vector.broadcast %72 : f32 to vector<8x128xf32>
    %76 = arith.mulf %75, %74 : vector<8x128xf32>
    %c0_20 = arith.constant 0 : index
    %c12 = arith.constant 12 : index
    %77 = memref.load %arg5[%c0_20, %c12] : memref<1x16xf32, #tpu.memory_space<smem>>
    %78 = vector.extract_strided_slice %16 {offsets = [12, 0, 0], sizes = [1, 8, 128], strides = [1, 1, 1]} : vector<16x8x128xf32> to vector<1x8x128xf32>
    %79 = vector.shape_cast %78 : vector<1x8x128xf32> to vector<8x128xf32>
    %80 = vector.broadcast %77 : f32 to vector<8x128xf32>
    %81 = arith.mulf %80, %79 : vector<8x128xf32>
    %c0_21 = arith.constant 0 : index
    %c13 = arith.constant 13 : index
    %82 = memref.load %arg5[%c0_21, %c13] : memref<1x16xf32, #tpu.memory_space<smem>>
    %83 = vector.extract_strided_slice %16 {offsets = [13, 0, 0], sizes = [1, 8, 128], strides = [1, 1, 1]} : vector<16x8x128xf32> to vector<1x8x128xf32>
    %84 = vector.shape_cast %83 : vector<1x8x128xf32> to vector<8x128xf32>
    %85 = vector.broadcast %82 : f32 to vector<8x128xf32>
    %86 = arith.mulf %85, %84 : vector<8x128xf32>
    %c0_22 = arith.constant 0 : index
    %c14 = arith.constant 14 : index
    %87 = memref.load %arg5[%c0_22, %c14] : memref<1x16xf32, #tpu.memory_space<smem>>
    %88 = vector.extract_strided_slice %16 {offsets = [14, 0, 0], sizes = [1, 8, 128], strides = [1, 1, 1]} : vector<16x8x128xf32> to vector<1x8x128xf32>
    %89 = vector.shape_cast %88 : vector<1x8x128xf32> to vector<8x128xf32>
    %90 = vector.broadcast %87 : f32 to vector<8x128xf32>
    %91 = arith.mulf %90, %89 : vector<8x128xf32>
    %c0_23 = arith.constant 0 : index
    %c15 = arith.constant 15 : index
    %92 = memref.load %arg5[%c0_23, %c15] : memref<1x16xf32, #tpu.memory_space<smem>>
    %93 = vector.extract_strided_slice %16 {offsets = [15, 0, 0], sizes = [1, 8, 128], strides = [1, 1, 1]} : vector<16x8x128xf32> to vector<1x8x128xf32>
    %94 = vector.shape_cast %93 : vector<1x8x128xf32> to vector<8x128xf32>
    %95 = vector.broadcast %92 : f32 to vector<8x128xf32>
    %96 = arith.mulf %95, %94 : vector<8x128xf32>
    %97 = arith.addf %21, %26 : vector<8x128xf32>
    %98 = arith.addf %31, %36 : vector<8x128xf32>
    %99 = arith.addf %41, %46 : vector<8x128xf32>
    %100 = arith.addf %51, %56 : vector<8x128xf32>
    %101 = arith.addf %61, %66 : vector<8x128xf32>
    %102 = arith.addf %71, %76 : vector<8x128xf32>
    %103 = arith.addf %81, %86 : vector<8x128xf32>
    %104 = arith.addf %91, %96 : vector<8x128xf32>
    %105 = arith.addf %97, %98 : vector<8x128xf32>
    %106 = arith.addf %99, %100 : vector<8x128xf32>
    %107 = arith.addf %101, %102 : vector<8x128xf32>
    %108 = arith.addf %103, %104 : vector<8x128xf32>
    %109 = arith.addf %105, %106 : vector<8x128xf32>
    %110 = arith.addf %107, %108 : vector<8x128xf32>
    %111 = arith.addf %109, %110 : vector<8x128xf32>
    %112 = tpu.iota {dimensions = array<i32: 1>} : vector<8x128xi32>
    %c8_i32 = arith.constant 8 : i32
    %113 = vector.broadcast %c8_i32 : i32 to vector<8x128xi32>
    %114 = arith.cmpi slt, %112, %113 : vector<8x128xi32>
    %cst_24 = arith.constant -1.000000e+30 : f32
    %115 = vector.broadcast %cst_24 : f32 to vector<8x128xf32>
    %116 = arith.select %114, %111, %115 : vector<8x128xi1>, vector<8x128xf32>
    %cst_25 = arith.constant dense<0xFF800000> : vector<8xf32>
    %117 = vector.multi_reduction <maximumf>, %116, %cst_25 [1] : vector<8x128xf32> to vector<8xf32>
    %118 = vector.shape_cast %117 : vector<8xf32> to vector<8x1xf32>
    %119 = vector.broadcast %118 : vector<8x1xf32> to vector<8x128xf32>
    %120 = arith.subf %116, %119 : vector<8x128xf32>
    %121 = math.exp %120 : vector<8x128xf32>
    %cst_26 = arith.constant dense<0.000000e+00> : vector<8xf32>
    %122 = vector.multi_reduction <add>, %121, %cst_26 [1] : vector<8x128xf32> to vector<8xf32>
    %123 = vector.shape_cast %122 : vector<8xf32> to vector<8x1xf32>
    %124 = tpu.reciprocal %123 {approx = true} : vector<8x1xf32> -> vector<8x1xf32>
    %125 = vector.broadcast %124 : vector<8x1xf32> to vector<8x128xf32>
    %126 = arith.mulf %121, %125 : vector<8x128xf32>
    %127 = arith.truncf %126 : vector<8x128xf32> to vector<8x128xbf16>
    %cst_27 = arith.constant dense<0.000000e+00> : vector<8x128xf32>
    %128 = tpu.matmul %127, %11, %cst_27 {dimension_numbers = #tpu.dot_dimension_numbers<[1], [0], [0], [1], [0, 0, 1, 1], [], []>} : vector<8x128xbf16>, vector<128x128xbf16>, vector<8x128xf32> -> vector<8x128xf32>
    %c0_28 = arith.constant 0 : index
    %c0_29 = arith.constant 0 : index
    %c0_30 = arith.constant 0 : index
    %129 = vector.load %arg6[%c0_28, %c0_29, %c0_30] : memref<1x8x128xf32, #tpu.memory_space<vmem>>, vector<1x8x128xf32>
    %130 = vector.shape_cast %129 : vector<1x8x128xf32> to vector<8x128xf32>
    %131 = vector.shape_cast %128 : vector<8x128xf32> to vector<1x8x128xf32>
    tpu.vector_store %arg6[%c0_28, %c0_29, %c0_30], %131 {strides = array<i32>} : memref<1x8x128xf32, #tpu.memory_space<vmem>>, vector<1x8x128xf32>,
    return
  }
  func.func @transform_0(%arg0: i32, %arg1: i32) -> (i32, i32, i32) {
    %c0_i32 = arith.constant 0 : i32
    %c0_i32_0 = arith.constant 0 : i32
    %c0_i32_1 = arith.constant 0 : i32
    return %arg0, %c0_i32, %c0_i32_0 : i32, i32, i32
  }
  func.func @transform_1(%arg0: i32, %arg1: i32) -> (i32, i32, i32) {
    %c0_i32 = arith.constant 0 : i32
    %c0_i32_0 = arith.constant 0 : i32
    return %arg0, %arg1, %c0_i32 : i32, i32, i32
  }
  func.func @transform_2(%arg0: i32, %arg1: i32) -> (i32, i32) {
    %c0_i32 = arith.constant 0 : i32
    %c0_i32_0 = arith.constant 0 : i32
    %c0_i32_1 = arith.constant 0 : i32
    return %c0_i32, %c0_i32_0 : i32, i32
  }
  func.func @transform_3(%arg0: i32, %arg1: i32) -> (i32, i32) {
    %c0_i32 = arith.constant 0 : i32
    %c0_i32_0 = arith.constant 0 : i32
    %c0_i32_1 = arith.constant 0 : i32
    return %c0_i32, %c0_i32_0 : i32, i32
  }
  func.func @transform_4(%arg0: i32, %arg1: i32) -> (i32, i32, i32) {
    %c0_i32 = arith.constant 0 : i32
    %c0_i32_0 = arith.constant 0 : i32
    return %arg0, %arg1, %c0_i32 : i32, i32, i32
  }
}

</mosaic_0001>

<llo_original>
// kernel: dot_attention_unit.1
$region0: #{dot_attention_unit.1}
  #allocation0 [shape = 'u32[]', space=smem, size = 0x4, offset = 0x4, fixed_abs, tag = 'smem constant byte address 0x4 - core index']
  #allocation1 [shape = 'u32[72,128]{1,0:T(1,128)}', space=vmem, size = 0x9000, scoped, tag = 'internal scratch']
  %s0 = inlined_call_operand.vmem [shape: f32[2,128,128], index: 0, kind: input, shape index: {}]
  %s1 = inlined_call_operand.vmem [shape: f32[2,8,128], index: 1, kind: input, shape index: {}]
  %s2 = inlined_call_operand.vmem [shape: f32[16,128], index: 2, kind: input, shape index: {}]
  %s3 = inlined_call_operand.vmem [shape: f32[1,16], index: 3, kind: input, shape index: {}]
  %s4 = inlined_call_operand.hbm [shape: f32[2,8,128], index: 4, kind: output, shape index: {}]
  %s5 = sld [smem:[#allocation0]]
  $region53: #{dot_attention_unit.1} parent=0
    _
  %s7 = ssub.s32 1, %s5
  %s8 = scalar_select 0, %s7, %s5
  $region1: #{dot_attention_unit.1} parent=0
    #allocation2 [shape = 'u8[512]{0}', space=smem, size = 0x200, scoped, tag = 'input window, operand 3, single buffered']
    #allocation3 [shape = 's32[2]{0}', space=sflag, size = 0x8, scoped, tag = 'scoped memory for dot_attention_unit.1']
    #allocation4 [shape = 's32[2]{0}', space=sflag, size = 0x8, scoped, tag = 'scoped memory for dot_attention_unit.1']
    #allocation5 [shape = 'u8[8192]{0}', space=vmem, size = 0x2000, scoped, tag = 'output window, operand 0']
    %9 = vsyncpa [#allocation4], 0
    %10 = vsyncpa [#allocation3], 0
    %s11 = scalar_lea.sflag [#allocation3], 1
    %12 = vsyncpa %s11, 0
    loop: start=0, step=1, limit=4
    $region2: #{dot_attention_unit.1} parent=1 // loop_pre_header
      _
    $region3: #{dot_attention_unit.1} parent=1 // loop_header
      %s14 = sphi 0, %s18
      %p15 = scmp.ge.s32.totalorder %s14, 4
      %s21 = sphi 0, %s33
      %s22 = sphi 0, %s29
      %s23 = sphi 0, %s21
      %s24 = sphi 0, %s22
      %s25 = sphi 0, %s23
      %s26 = sphi 0, %s24
      %s36 = sphi 0, %s38
      %s39 = sphi 0, %s36
      %s40 = sphi 0, %s39
      %s56 = sphi 0, %s40
      %s64 = sphi 0, %s66
      %s67 = sphi 0, %s64
      %s68 = sphi 0, %s67
      %s84 = sphi 0, %s68
      %s88 = sphi 0, %s88
      %s90 = sphi 0, %s88
      %s91 = sphi 0, %s90
      %s105 = sphi 0, %s91
      %s109 = sphi 0, %s109
      %s111 = sphi 0, %s109
      %s112 = sphi 0, %s111
      %s126 = sphi 0, %s112
      %s134 = sphi 0, %s136
      %s137 = sphi 0, %s134
      %s138 = sphi 0, %s137
      %s154 = sphi 0, %s138
    $region4: #{dot_attention_unit.1} parent=1 // loop_header_branch
      %17 = sbr.rel (%p15) target = $region8
    $region5: #{dot_attention_unit.1} parent=1 // loop_body
      %s19 = ssub.s32 %s14, 1
      %s20 = ssub.s32 %s14, 2
      %s27 = sadd.s32 1, %s22
      %p28 = scmp.ge.s32.totalorder %s27, 1
      %s29 = scalar_select %p28, 0, %s27
      %s30 = sadd.s32 1, %s21
      %s31 = scalar_select %p28, %s30, %s21
      %p32 = scmp.ge.s32.totalorder %s31, 2
      %s33 = scalar_select %p32, 0, %s31
      %s34 = ssub.s32 %s21, %s33
      %p35 = scmp.eq.s32.totalorder %s34, 0
      %s37 = sadd.s32 %s36, 1
      %s38 = scalar_select %p35, %s36, %s37
      %p41 = pneg %p35
      %p42 = scmp.eq.s32.totalorder %s14, 1
      %p43 = por %p41, %p42
      %p44 = scmp.ne.s32.totalorder %s36, %s39
      %p45 = scmp.eq.s32.totalorder %s14, 0
      %p46 = por %p44, %p45
      %p47 = scmp.ne.s32.totalorder %s36, %s39
      %p48 = scmp.eq.s32.totalorder %s19, 1
      %p49 = por %p47, %p48
      %p50 = scmp.ne.s32.totalorder %s39, %s40
      %p51 = scmp.eq.s32.totalorder %s19, 0
      %p52 = por %p50, %p51
      %p53 = scmp.ne.s32.totalorder %s39, %s40
      %p54 = scmp.eq.s32.totalorder %s20, 1
      %p55 = por %p53, %p54
      %p57 = scmp.ne.s32.totalorder %s40, %s56
      %p58 = scmp.eq.s32.totalorder %s20, 0
      %p59 = por %p57, %p58
      %s60 = ssub.s32 %s21, %s33
      %s61 = ssub.s32 %s22, %s29
      %s62 = sor.u32 %s60, %s61
      %p63 = scmp.eq.s32.totalorder %s62, 0
      %s65 = sadd.s32 %s64, 1
      %s66 = scalar_select %p63, %s64, %s65
      %p69 = pneg %p63
      %p70 = scmp.eq.s32.totalorder %s14, 1
      %p71 = por %p69, %p70
      %p72 = scmp.ne.s32.totalorder %s64, %s67
      %p73 = scmp.eq.s32.totalorder %s14, 0
      %p74 = por %p72, %p73
      %p75 = scmp.ne.s32.totalorder %s64, %s67
      %p76 = scmp.eq.s32.totalorder %s19, 1
      %p77 = por %p75, %p76
      %p78 = scmp.ne.s32.totalorder %s67, %s68
      %p79 = scmp.eq.s32.totalorder %s19, 0
      %p80 = por %p78, %p79
      %p81 = scmp.ne.s32.totalorder %s67, %s68
      %p82 = scmp.eq.s32.totalorder %s20, 1
      %p83 = por %p81, %p82
      %p85 = scmp.ne.s32.totalorder %s68, %s84
      %p86 = scmp.eq.s32.totalorder %s20, 0
      %p87 = por %p85, %p86
      %s89 = sadd.s32 %s88, 1
      %p92 = scmp.eq.s32.totalorder %s14, 1
      %p93 = scmp.ne.s32.totalorder %s88, %s90
      %p94 = scmp.eq.s32.totalorder %s14, 0
      %p95 = por %p93, %p94
      %p96 = scmp.ne.s32.totalorder %s88, %s90
      %p97 = scmp.eq.s32.totalorder %s19, 1
      %p98 = por %p96, %p97
      %p99 = scmp.ne.s32.totalorder %s90, %s91
      %p100 = scmp.eq.s32.totalorder %s19, 0
      %p101 = por %p99, %p100
      %p102 = scmp.ne.s32.totalorder %s90, %s91
      %p103 = scmp.eq.s32.totalorder %s20, 1
      %p104 = por %p102, %p103
      %p106 = scmp.ne.s32.totalorder %s91, %s105
      %p107 = scmp.eq.s32.totalorder %s20, 0
      %p108 = por %p106, %p107
      %s110 = sadd.s32 %s109, 1
      %p113 = scmp.eq.s32.totalorder %s14, 1
      %p114 = scmp.ne.s32.totalorder %s109, %s111
      %p115 = scmp.eq.s32.totalorder %s14, 0
      %p116 = por %p114, %p115
      %p117 = scmp.ne.s32.totalorder %s109, %s111
      %p118 = scmp.eq.s32.totalorder %s19, 1
      %p119 = por %p117, %p118
      %p120 = scmp.ne.s32.totalorder %s111, %s112
      %p121 = scmp.eq.s32.totalorder %s19, 0
      %p122 = por %p120, %p121
      %p123 = scmp.ne.s32.totalorder %s111, %s112
      %p124 = scmp.eq.s32.totalorder %s20, 1
      %p125 = por %p123, %p124
      %p127 = scmp.ne.s32.totalorder %s112, %s126
      %p128 = scmp.eq.s32.totalorder %s20, 0
      %p129 = por %p127, %p128
      %s130 = ssub.s32 %s21, %s33
      %s131 = ssub.s32 %s22, %s29
      %s132 = sor.u32 %s130, %s131
      %p133 = scmp.eq.s32.totalorder %s132, 0
      %s135 = sadd.s32 %s134, 1
      %s136 = scalar_select %p133, %s134, %s135
      %p139 = pneg %p133
      %p140 = scmp.eq.s32.totalorder %s14, 1
      %p141 = por %p139, %p140
      %p142 = scmp.ne.s32.totalorder %s134, %s137
      %p143 = scmp.eq.s32.totalorder %s14, 0
      %p144 = por %p142, %p143
      %p145 = scmp.ne.s32.totalorder %s134, %s137
      %p146 = scmp.eq.s32.totalorder %s19, 1
      %p147 = por %p145, %p146
      %p148 = scmp.ne.s32.totalorder %s137, %s138
      %p149 = scmp.eq.s32.totalorder %s19, 0
      %p150 = por %p148, %p149
      %p151 = scmp.ne.s32.totalorder %s137, %s138
      %p152 = scmp.eq.s32.totalorder %s20, 1
      %p153 = por %p151, %p152
      %p155 = scmp.ne.s32.totalorder %s138, %s154
      %p156 = scmp.eq.s32.totalorder %s20, 0
      %p157 = por %p155, %p156
      %p158 = scmp.le.s32.totalorder 1, %s14
      %p159 = scmp.lt.s32.totalorder %s14, 3
      %p160 = pnand %p158, %p159
      %p161 = pneg %p160
      // Predicated region
      $region9: #{dot_attention_unit.1} parent=5 // pred_check
        _
      $region10: #{dot_attention_unit.1} parent=5 // pred_check_branch
        %163 = sbr.rel (%p160) target = $region12
      $region11: #{dot_attention_unit.1} parent=5 // pred_region
        %s164 = ssub.s32 %s14, 1
        // Predicated region
        $region13: #{dot_attention_unit.1} parent=11 // pred_check
          %p165 = pneg %p101
        $region14: #{dot_attention_unit.1} parent=11 // pred_check_branch
          %167 = sbr.rel (%p165) target = $region16
        $region15: #{dot_attention_unit.1} parent=11 // pred_region
          _
        $region16: #{dot_attention_unit.1} parent=11 // pred_fallthru
          _
        // Predicated region
        $region17: #{dot_attention_unit.1} parent=11 // pred_check
          %p168 = pneg %p122
        $region18: #{dot_attention_unit.1} parent=11 // pred_check_branch
          %170 = sbr.rel (%p168) target = $region20
        $region19: #{dot_attention_unit.1} parent=11 // pred_region
          %172 = vsyncadd [#allocation4], 0
          %s174 = sshll.u32 %s3, 4
          %s175 = int_to_ptr.vmem [resolvable:$true] %s174
          %177 = dma.vmem_to_smem %s175, 16, [#allocation2], [#allocation4]
        $region20: #{dot_attention_unit.1} parent=11 // pred_fallthru
          _
      $region12: #{dot_attention_unit.1} parent=5 // pred_fallthru
        _
      %p178 = scmp.lt.s32.totalorder %s14, 2
      // Predicated region
      $region21: #{dot_attention_unit.1} parent=5 // pred_check
        %p179 = pneg %p178
      $region22: #{dot_attention_unit.1} parent=5 // pred_check_branch
        %181 = sbr.rel (%p179) target = $region24
      $region23: #{dot_attention_unit.1} parent=5 // pred_region
        // Predicated region
        $region25: #{dot_attention_unit.1} parent=23 // pred_check
          %p182 = pneg %p46
        $region26: #{dot_attention_unit.1} parent=23 // pred_check_branch
          %184 = sbr.rel (%p182) target = $region28
        $region27: #{dot_attention_unit.1} parent=23 // pred_region
          %p185 = scmp.lt.s32.totalorder %s21, 1
          %s186 = scalar_select %p185, %s21, 1
          %s187 = smul.addr %s186, 16
          %s188 = smul.addr %s187, 8
          %s189 = scalar_lea.vmem %s0, %s188
        $region28: #{dot_attention_unit.1} parent=23 // pred_fallthru
          _
        // Predicated region
        $region29: #{dot_attention_unit.1} parent=23 // pred_check
          %p190 = pneg %p74
        $region30: #{dot_attention_unit.1} parent=23 // pred_check_branch
          %192 = sbr.rel (%p190) target = $region32
        $region31: #{dot_attention_unit.1} parent=23 // pred_region
          %p193 = scmp.lt.s32.totalorder %s21, 1
          %s194 = scalar_select %p193, %s21, 1
          %p195 = scmp.lt.s32.totalorder %s22, 0
          %s196 = scalar_select %p195, %s22, 0
          %s197 = sadd.s32 %s196, %s194
          %s198 = smul.addr %s197, 8
          %s199 = scalar_lea.vmem %s1, %s198
        $region32: #{dot_attention_unit.1} parent=23 // pred_fallthru
          _
      $region24: #{dot_attention_unit.1} parent=5 // pred_fallthru
        _
      %p200 = scmp.le.s32.totalorder 1, %s14
      %p201 = scmp.lt.s32.totalorder %s14, 3
      %p202 = pnand %p200, %p201
      %p203 = pneg %p202
      // Predicated region
      $region33: #{dot_attention_unit.1} parent=5 // pred_check
        _
      $region34: #{dot_attention_unit.1} parent=5 // pred_check_branch
        %205 = sbr.rel (%p202) target = $region36
      $region35: #{dot_attention_unit.1} parent=5 // pred_region
        %s206 = ssub.s32 %s14, 1
        // Predicated region
        $region37: #{dot_attention_unit.1} parent=35 // pred_check
          %p207 = pneg %p122
        $region38: #{dot_attention_unit.1} parent=35 // pred_check_branch
          %209 = sbr.rel (%p207) target = $region40
        $region39: #{dot_attention_unit.1} parent=35 // pred_region
          %211 = dma.done [#allocation4], 16
        $region40: #{dot_attention_unit.1} parent=35 // pred_fallthru
          _
        %212 = sfence
        %p213 = scmp.lt.s32.totalorder %s23, 1
        %s214 = scalar_select %p213, %s23, 1
        %s215 = smul.addr %s214, 16
        %s216 = smul.addr %s215, 8
        %s217 = scalar_lea.vmem %s0, %s216
        %p218 = pneg %p52
        %p219 = pneg %p49
        %p220 = scmp.lt.s32.totalorder %s23, 1
        %s221 = scalar_select %p220, %s23, 1
        %p222 = scmp.lt.s32.totalorder %s24, 0
        %s223 = scalar_select %p222, %s24, 0
        %s224 = sadd.s32 %s223, %s221
        %s225 = smul.addr %s224, 8
        %s226 = scalar_lea.vmem %s1, %s225
        %p227 = pneg %p80
        %p228 = pneg %p77
        %p229 = pneg %p101
        %p230 = pneg %p98
        %p231 = pneg %p122
        %p232 = pneg %p119
        %p233 = pneg %p150
        %p234 = pneg %p147
        %s235 = sand.u32 %s137, 1
        %s236 = scalar_lea.sflag [#allocation3], %s235
        %s237 = sand.u32 %s137, 1
        %s238 = smul.addr %s237, 8
        %s239 = scalar_lea.vmem [#allocation5], %s238
        %p240 = scmp.lt.s32.totalorder %s23, 1
        %s241 = scalar_select %p240, %s23, 1
        %s242 = smul.addr %s241, 16
        %s243 = smul.addr %s242, 8
        %s244 = scalar_lea.vmem %s0, %s243
        %p245 = scmp.lt.s32.totalorder %s23, 1
        %s246 = scalar_select %p245, %s23, 1
        %p247 = scmp.lt.s32.totalorder %s24, 0
        %s248 = scalar_select %p247, %s24, 0
        %s249 = sadd.s32 %s248, %s246
        %s250 = smul.addr %s249, 8
        %s251 = scalar_lea.vmem %s1, %s250
        %v252 = vld [vmem:[%s244] sm:$0xff]
        %v253 = vld [vmem:[%s244 + $0x8] sm:$0xff]
        %v254 = vld [vmem:[%s244 + $0x10] sm:$0xff]
        %v255 = vld [vmem:[%s244 + $0x18] sm:$0xff]
        %v256 = vld [vmem:[%s244 + $0x20] sm:$0xff]
        %v257 = vld [vmem:[%s244 + $0x28] sm:$0xff]
        %v258 = vld [vmem:[%s244 + $0x30] sm:$0xff]
        %v259 = vld [vmem:[%s244 + $0x38] sm:$0xff]
        %v260 = vld [vmem:[%s244 + $0x40] sm:$0xff]
        %v261 = vld [vmem:[%s244 + $0x48] sm:$0xff]
        %v262 = vld [vmem:[%s244 + $0x50] sm:$0xff]
        %v263 = vld [vmem:[%s244 + $0x58] sm:$0xff]
        %v264 = vld [vmem:[%s244 + $0x60] sm:$0xff]
        %v265 = vld [vmem:[%s244 + $0x68] sm:$0xff]
        %v266 = vld [vmem:[%s244 + $0x70] sm:$0xff]
        %v267 = vld [vmem:[%s244 + $0x78] sm:$0xff]
        %v268 = vld [vmem:[%s251] sm:$0xff]
        %v269 = vld [vmem:[%s2] sm:$0xff]
        %v270 = vld [vmem:[%s2 + $0x8] sm:$0xff]
        %v273 = vrot.slane %v269, 1
        %v274 = vrot.slane %v269, 2
        %v275 = vrot.slane %v269, 3
        %v276 = vrot.slane %v269, 4
        %v277 = vrot.slane %v269, 5
        %v278 = vrot.slane %v269, 6
        %v279 = vrot.slane %v269, 7
        %v280 = vrot.slane %v270, 1
        %v281 = vrot.slane %v270, 2
        %v282 = vrot.slane %v270, 3
        %v283 = vrot.slane %v270, 4
        %v284 = vrot.slane %v270, 5
        %v285 = vrot.slane %v270, 6
        %v286 = vrot.slane %v270, 7
        %v287 = vperm.slane %v269, 0
        %v288 = vperm.slane %v273, 0
        %v289 = vperm.slane %v274, 0
        %v290 = vperm.slane %v275, 0
        %v291 = vperm.slane %v276, 0
        %v292 = vperm.slane %v277, 0
        %v293 = vperm.slane %v278, 0
        %v294 = vperm.slane %v279, 0
        %v295 = vperm.slane %v270, 0
        %v296 = vperm.slane %v280, 0
        %v297 = vperm.slane %v281, 0
        %v298 = vperm.slane %v282, 0
        %v299 = vperm.slane %v283, 0
        %v300 = vperm.slane %v284, 0
        %v301 = vperm.slane %v285, 0
        %v302 = vperm.slane %v286, 0
        %v319 = vmul.f32 %v287, %v268
        %v320 = vmul.f32 %v288, %v268
        %v321 = vmul.f32 %v289, %v268
        %v322 = vmul.f32 %v290, %v268
        %v323 = vmul.f32 %v291, %v268
        %v324 = vmul.f32 %v292, %v268
        %v325 = vmul.f32 %v293, %v268
        %v326 = vmul.f32 %v294, %v268
        %v327 = vmul.f32 %v295, %v268
        %v328 = vmul.f32 %v296, %v268
        %v329 = vmul.f32 %v297, %v268
        %v330 = vmul.f32 %v298, %v268
        %v331 = vmul.f32 %v299, %v268
        %v332 = vmul.f32 %v300, %v268
        %v333 = vmul.f32 %v301, %v268
        %v334 = vmul.f32 %v302, %v268
        %v335 = vpack.c.bf16 %v253, %v252
        %v336 = vpack.c.bf16 %v255, %v254
        %v337 = vpack.c.bf16 %v257, %v256
        %v338 = vpack.c.bf16 %v259, %v258
        %v339 = vpack.c.bf16 %v261, %v260
        %v340 = vpack.c.bf16 %v263, %v262
        %v341 = vpack.c.bf16 %v265, %v264
        %v342 = vpack.c.bf16 %v267, %v266
        %v343 = vpack.c.bf16 %v320, %v319
        %v344 = vpack.c.bf16 %v322, %v321
        %v345 = vpack.c.bf16 %v324, %v323
        %v346 = vpack.c.bf16 %v326, %v325
        %v347 = vpack.c.bf16 %v328, %v327
        %v348 = vpack.c.bf16 %v330, %v329
        %v349 = vpack.c.bf16 %v332, %v331
        %v350 = vpack.c.bf16 %v334, %v333
        %351 = vmatpush.bf16.xpose.msra.mxu0 %v342
        %352 = vmatpush.bf16.xpose.msra.mxu0 %v341
        %353 = vmatpush.bf16.xpose.msra.mxu0 %v340
        %354 = vmatpush.bf16.xpose.msra.mxu0 %v339
        %355 = vmatpush.bf16.xpose.msra.mxu0 %v338
        %356 = vmatpush.bf16.xpose.msra.mxu0 %v337
        %357 = vmatpush.bf16.xpose.msra.mxu0 %v336
        %358 = vmatpush.bf16.xpose.msra.mxu0 %v335
        %359 = vmatmul.bf16.gmra.mxu0 %v343
        %v360 = vpop.f32.mrf.mxu0
        %v361 = vadd.f32 0.0, %v360
        %v362 = vpop.f32.mrf.mxu0
        %v363 = vadd.f32 0.0, %v362
        %364 = vmatmul.bf16.gmra.mxu0 %v344
        %v365 = vpop.f32.mrf.mxu0
        %v366 = vadd.f32 0.0, %v365
        %v367 = vpop.f32.mrf.mxu0
        %v368 = vadd.f32 0.0, %v367
        %369 = vmatmul.bf16.gmra.mxu0 %v345
        %v370 = vpop.f32.mrf.mxu0
        %v371 = vadd.f32 0.0, %v370
        %v372 = vpop.f32.mrf.mxu0
        %v373 = vadd.f32 0.0, %v372
        %374 = vmatmul.bf16.gmra.mxu0 %v346
        %v375 = vpop.f32.mrf.mxu0
        %v376 = vadd.f32 0.0, %v375
        %v377 = vpop.f32.mrf.mxu0
        %v378 = vadd.f32 0.0, %v377
        %379 = vmatmul.bf16.gmra.mxu0 %v347
        %v380 = vpop.f32.mrf.mxu0
        %v381 = vadd.f32 0.0, %v380
        %v382 = vpop.f32.mrf.mxu0
        %v383 = vadd.f32 0.0, %v382
        %384 = vmatmul.bf16.gmra.mxu0 %v348
        %v385 = vpop.f32.mrf.mxu0
        %v386 = vadd.f32 0.0, %v385
        %v387 = vpop.f32.mrf.mxu0
        %v388 = vadd.f32 0.0, %v387
        %389 = vmatmul.bf16.gmra.mxu0 %v349
        %v390 = vpop.f32.mrf.mxu0
        %v391 = vadd.f32 0.0, %v390
        %v392 = vpop.f32.mrf.mxu0
        %v393 = vadd.f32 0.0, %v392
        %394 = vmatmul.bf16.gmra.mxu0 %v350
        %v395 = vpop.f32.mrf.mxu0
        %v396 = vadd.f32 0.0, %v395
        %v397 = vpop.f32.mrf.mxu0
        %v398 = vadd.f32 0.0, %v397
        %399 = vdwg.mxu0
        %v400 = vtanh.pop %v361
        %v401 = vtanh.pop %v363
        %v402 = vtanh.pop %v366
        %v403 = vtanh.pop %v368
        %v404 = vtanh.pop %v371
        %v405 = vtanh.pop %v373
        %v406 = vtanh.pop %v376
        %v407 = vtanh.pop %v378
        %v408 = vtanh.pop %v381
        %v409 = vtanh.pop %v383
        %v410 = vtanh.pop %v386
        %v411 = vtanh.pop %v388
        %v412 = vtanh.pop %v391
        %v413 = vtanh.pop %v393
        %v414 = vtanh.pop %v396
        %v415 = vtanh.pop %v398
        %s416 = sld [smem:[#allocation2]]
        %v417 = vstv %s416
        %v418 = vmul.f32 %v417, %v400
        %s419 = sld [smem:[#allocation2 + $0x1]]
        %v420 = vstv %s419
        %v421 = vmul.f32 %v420, %v401
        %s422 = sld [smem:[#allocation2 + $0x2]]
        %v423 = vstv %s422
        %v424 = vmul.f32 %v423, %v402
        %s425 = sld [smem:[#allocation2 + $0x3]]
        %v426 = vstv %s425
        %v427 = vmul.f32 %v426, %v403
        %s428 = sld [smem:[#allocation2 + $0x4]]
        %v429 = vstv %s428
        %v430 = vmul.f32 %v429, %v404
        %s431 = sld [smem:[#allocation2 + $0x5]]
        %v432 = vstv %s431
        %v433 = vmul.f32 %v432, %v405
        %s434 = sld [smem:[#allocation2 + $0x6]]
        %v435 = vstv %s434
        %v436 = vmul.f32 %v435, %v406
        %s437 = sld [smem:[#allocation2 + $0x7]]
        %v438 = vstv %s437
        %v439 = vmul.f32 %v438, %v407
        %s440 = sld [smem:[#allocation2 + $0x8]]
        %v441 = vstv %s440
        %v442 = vmul.f32 %v441, %v408
        %s443 = sld [smem:[#allocation2 + $0x9]]
        %v444 = vstv %s443
        %v445 = vmul.f32 %v444, %v409
        %s446 = sld [smem:[#allocation2 + $0xa]]
        %v447 = vstv %s446
        %v448 = vmul.f32 %v447, %v410
        %s449 = sld [smem:[#allocation2 + $0xb]]
        %v450 = vstv %s449
        %v451 = vmul.f32 %v450, %v411
        %s452 = sld [smem:[#allocation2 + $0xc]]
        %v453 = vstv %s452
        %v454 = vmul.f32 %v453, %v412
        %s455 = sld [smem:[#allocation2 + $0xd]]
        %v456 = vstv %s455
        %v457 = vmul.f32 %v456, %v413
        %s458 = sld [smem:[#allocation2 + $0xe]]
        %v459 = vstv %s458
        %v460 = vmul.f32 %v459, %v414
        %s461 = sld [smem:[#allocation2 + $0xf]]
        %v462 = vstv %s461
        %v463 = vmul.f32 %v462, %v415
        %v464 = vadd.f32 %v418, %v421
        %v465 = vadd.f32 %v424, %v427
        %v466 = vadd.f32 %v430, %v433
        %v467 = vadd.f32 %v436, %v439
        %v468 = vadd.f32 %v442, %v445
        %v469 = vadd.f32 %v448, %v451
        %v470 = vadd.f32 %v454, %v457
        %v471 = vadd.f32 %v460, %v463
        %v472 = vadd.f32 %v464, %v465
        %v473 = vadd.f32 %v466, %v467
        %v474 = vadd.f32 %v468, %v469
        %v475 = vadd.f32 %v470, %v471
        %v476 = vadd.f32 %v472, %v473
        %v477 = vadd.f32 %v474, %v475
        %v478 = vadd.f32 %v476, %v477
        %v479 = vlaneseq
        %v480 = vand.u32 %v479, 127
        %vm481 = vcmp.lt.s32.totalorder %v480, 8
        %v482 = vsel %vm481, %v478, -1e+30
        %483 = vmax.xlane.f32.xlu0 %v482
        %v484 = vpop.xlane.xlu0 %483
        %v485 = vsub.f32 %v482, %v484
        %v486 = vmul.f32 %v485, 1.442695
        %v487 = vpow.pop %v486
        %488 = vadd.xlane.f32.xlu0 %v487
        %v489 = vpop.xlane.xlu0 %488
        %v490 = vrcp.pop %v489
        %v491 = vmul.f32 %v487, %v490
        %v492 = vpack.c.bf16 %v491, %v491
        %493 = vmatpush.bf16.msra.mxu0 %v342
        %494 = vmatpush.bf16.msra.mxu0 %v341
        %495 = vmatpush.bf16.msra.mxu0 %v340
        %496 = vmatpush.bf16.msra.mxu0 %v339
        %497 = vmatpush.bf16.msra.mxu0 %v338
        %498 = vmatpush.bf16.msra.mxu0 %v337
        %499 = vmatpush.bf16.msra.mxu0 %v336
        %500 = vmatpush.bf16.msra.mxu0 %v335
        %501 = vmatmul.bf16.gmra.mxu0 %v492
        %v502 = vpop.f32.mrf.mxu0
        %v503 = vadd.f32 0.0, %v502
        %v504 = vpop.f32.mrf.mxu0
        %505 = vdwg.mxu0
        %506 = vst [vmem:[%s239] sm:$0xff] %v503
        %s507 = sand.u32 %s137, 1
        %s508 = scalar_lea.sflag [#allocation3], %s507
        %s509 = sand.u32 %s137, 1
        %s510 = smul.addr %s509, 8
        %s511 = scalar_lea.vmem [#allocation5], %s510
        // Predicated region
        $region41: #{dot_attention_unit.1} parent=35 // pred_check
          %p512 = pneg %p147
        $region42: #{dot_attention_unit.1} parent=35 // pred_check_branch
          %514 = sbr.rel (%p512) target = $region44
        $region43: #{dot_attention_unit.1} parent=35 // pred_region
          %516 = vsyncadd %s508, 0
          %s517 = sadd.s32 %s24, %s23
          %s518 = smul.addr %s517, 8
          %s519 = scalar_lea.hbm %s4, %s518
          %s521 = sshll.u32 %s511, 4
          %s522 = int_to_ptr.vmem [resolvable:$true] %s521
          %s523 = sshll.u32 %s519, 4
          %s524 = int_to_ptr.hbm [resolvable:$true] %s523
          %526 = dma.vmem_to_hbm [thread:$0]  %s522, 128, %s524, %s508
        $region44: #{dot_attention_unit.1} parent=35 // pred_fallthru
          _
      $region36: #{dot_attention_unit.1} parent=5 // pred_fallthru
        _
      %p527 = scmp.le.s32.totalorder 2, %s14
      // Predicated region
      $region45: #{dot_attention_unit.1} parent=5 // pred_check
        %p528 = pneg %p527
      $region46: #{dot_attention_unit.1} parent=5 // pred_check_branch
        %530 = sbr.rel (%p528) target = $region48
      $region47: #{dot_attention_unit.1} parent=5 // pred_region
        %s531 = ssub.s32 %s14, 2
        // Predicated region
        $region49: #{dot_attention_unit.1} parent=47 // pred_check
          %p532 = pneg %p153
        $region50: #{dot_attention_unit.1} parent=47 // pred_check_branch
          %534 = sbr.rel (%p532) target = $region52
        $region51: #{dot_attention_unit.1} parent=47 // pred_region
          %s535 = sand.u32 %s138, 1
          %s536 = scalar_lea.sflag [#allocation3], %s535
          %s537 = sand.u32 %s138, 1
          %s538 = smul.addr %s537, 8
          %s539 = scalar_lea.vmem [#allocation5], %s538
          %541 = dma.done %s536, 128
        $region52: #{dot_attention_unit.1} parent=47 // pred_fallthru
          _
      $region48: #{dot_attention_unit.1} parent=5 // pred_fallthru
        _
    $region6: #{dot_attention_unit.1} parent=1 // loop_footer
      %s18 = sadd.s32 1, %s14
    $region7: #{dot_attention_unit.1} parent=1 // loop_footer_branch
      %13 = sbr.rel target = $region3
    $region8: #{dot_attention_unit.1} parent=1 // loop_exit
      _
    %542 = vsyncpa [#allocation3], 1
    %s543 = scalar_lea.sflag [#allocation3], 1
    %544 = vsyncpa %s543, 1
    %545 = vsyncpa [#allocation4], 1
    %s546 = scalar_lea.sflag [#allocation4], 1
    %547 = vsyncpa %s546, 1

</llo_original>
